<compile_context>
chip_gen: v7x
topology: tpu7x:2x2x1
jax: 0.10.0
libtpu: 0.0.40
codegen_flags: <defaults>
</compile_context>

<pallas_src>
import jax
import jax.numpy as jnp
from jax.experimental import pallas as pl
from jax.experimental.pallas import tpu as pltpu


def _round_up(x, m):
    return ((x + m - 1) // m) * m


def qnet_kernel(x_ref, w1t_ref, b1_ref, w2t_ref, b2_ref, w3_ref, b3_ref, o_ref):
    # fc1: [H1, Din] @ [Din, tile_b] -> [H1, tile_b], f32 accumulation on MXU.
    h = jnp.dot(w1t_ref[...], x_ref[...], preferred_element_type=jnp.float32)
    h = jnp.maximum(h + b1_ref[...], 0.0)                 # bias + relu in f32 (VPU)

    # fc2: [H2, H1] @ [H1, tile_b] -> [H2, tile_b] (operands may be bf16).
    h = jnp.dot(w2t_ref[...], h.astype(w2t_ref.dtype),
                preferred_element_type=jnp.float32)
    h = jnp.maximum(h + b2_ref[...], 0.0)

    # fc3: [H2, tile_b] . [H2, 1] -> VPU multiply + sublane reduce; result is a
    # lane-dense (1, tile_b) row (unmasked stores).
    q = jnp.sum(h * w3_ref[...], axis=0, keepdims=True) + b3_ref[0]
    o_ref[...] = q.astype(o_ref.dtype)


def qnet_forward(state, action, params, *, tile_b=16384, matmul_dtype=jnp.bfloat16):
    """state: [B, dim_state], action: [B, dim_action] -> q: [B, 1] float32."""
    w1, b1, w2, b2, w3, b3 = params
    B, ds = state.shape
    da = action.shape[1]
    Din = ds + da
    H1 = w1.shape[1]
    H2 = w2.shape[1]

    # Feature-major (lane-dense) layout: batch on the lane axis.  The torch.cat
    # is absorbed into this layout step (single [Din, B] input slab, single
    # [H1, Din] weight -> one fc1 dot instead of two tiny-K dots).
    x_t = jnp.concatenate([state.T, action.T], axis=0)          # [Din, B]
    w1t = w1.T                                                  # [H1, Din]
    w2t = w2.T                                                  # [H2, H1]

    if matmul_dtype is not None and matmul_dtype != x_t.dtype:
        # NOTE: this also rounds the *inputs* to bf16 (not just MXU operands);
        # fine for a critic, accumulation/bias/relu stay f32.
        x_t = x_t.astype(matmul_dtype)
        w1t = w1t.astype(matmul_dtype)
        w2t = w2t.astype(matmul_dtype)

    # Elementwise path stays f32 (also required on v5e: no bf16 VPU).
    w3c = w3.reshape(H2, 1).astype(jnp.float32)
    b1c = b1.reshape(H1, 1).astype(jnp.float32)
    b2c = b2.reshape(H2, 1).astype(jnp.float32)
    b3c = b3.reshape(1).astype(jnp.float32)

    # Batch tile: lane-aligned (multiple of 128), large by default, and capped
    # at ~B/4 so the "parallel" grid axis keeps >=2 steps for v7x megacore.
    tile = max(128, min(_round_up(tile_b, 128), _round_up(pl.cdiv(B, 4), 128)))
    if tile >= B:
        tile = B                      # one block covering the whole (small) batch
    grid = (pl.cdiv(B, tile),)

    resident = lambda shape: pl.BlockSpec(shape, lambda i: (0, 0))  # stays in VMEM

    in_itemsize = jnp.dtype(x_t.dtype).itemsize
    w_itemsize = jnp.dtype(w1t.dtype).itemsize
    flops = 2 * B * (Din * H1 + H1 * H2 + H2)
    bytes_accessed = (
        B * Din * in_itemsize + B * 4
        + (Din * H1 + H1 * H2) * w_itemsize
        + (H1 + H2 + H2 + 1) * 4
    )

    q_row = pl.pallas_call(
        qnet_kernel,
        out_shape=jax.ShapeDtypeStruct((1, B), jnp.float32),
        grid=grid,
        in_specs=[
            pl.BlockSpec((Din, tile), lambda i: (0, i)),        # input slab (pipelined)
            resident((H1, Din)),                                # w1^T
            resident((H1, 1)),                                  # b1 (f32)
            resident((H2, H1)),                                 # w2^T
            resident((H2, 1)),                                  # b2 (f32)
            resident((H2, 1)),                                  # w3 column (f32)
            pl.BlockSpec(memory_space=pltpu.MemorySpace.SMEM),  # b3 scalar
        ],
        out_specs=pl.BlockSpec((1, tile), lambda i: (0, i)),    # lane-dense output row
        compiler_params=pltpu.CompilerParams(
            dimension_semantics=("parallel",),
        ),
        cost_estimate=pl.CostEstimate(
            flops=flops, transcendentals=0, bytes_accessed=bytes_accessed),
    )(x_t, w1t, b1c, w2t, b2c, w3c, b3c)

    return q_row.reshape(B, 1)                                  # match PyTorch [B, 1]


def init_linear(key, fan_in, fan_out):
    """Deterministic PyTorch-Linear-style init: U(-1/sqrt(fan_in), 1/sqrt(fan_in))."""
    kw, kb = jax.random.split(key)
    bound = 1.0 / jnp.sqrt(jnp.float32(fan_in))
    w = jax.random.uniform(kw, (fan_in, fan_out), jnp.float32, -bound, bound)
    b = jax.random.uniform(kb, (1, fan_out), jnp.float32, -bound, bound)
    return w, b


if __name__ == "__main__":
    key = jax.random.PRNGKey(0)
    k_state, k_action, k1, k2, k3 = jax.random.split(key, 5)

    batch = 8
    dim_state = 12
    dim_action = 4

    state = jax.random.normal(k_state, (batch, dim_state), jnp.float32)
    action = jax.random.normal(k_action, (batch, dim_action), jnp.float32)

    w1, b1 = init_linear(k1, dim_state + dim_action, 64)
    w2, b2 = init_linear(k2, 64, 32)
    w3, b3 = init_linear(k3, 32, 1)
    params = (w1, b1, w2, b2, w3, b3)

    def ref_fwd(s, a):
        sa = jnp.concatenate([s, a], -1)
        h = jnp.maximum(sa @ w1 + b1, 0.0)
        h = jnp.maximum(h @ w2 + b2, 0.0)
        return h @ w3 + b3

    # Exact f32 path (same math as the PyTorch module), tiny batch / single tile.
    q = qnet_forward(state, action, params, matmul_dtype=None)
    jax.block_until_ready(q)
    ref = ref_fwd(state, action)
    assert q.shape == (batch, 1)
    assert jnp.allclose(q, ref, atol=1e-5, rtol=1e-5)

    # Default bf16-operand path, multi-tile grid with a partial final tile.
    batch2 = 400
    state2 = jax.random.normal(jax.random.PRNGKey(1), (batch2, dim_state), jnp.float32)
    action2 = jax.random.normal(jax.random.PRNGKey(2), (batch2, dim_action), jnp.float32)
    q_bf16 = qnet_forward(state2, action2, params)
    jax.block_until_ready(q_bf16)
    ref2 = ref_fwd(state2, action2)
    assert q_bf16.shape == (batch2, 1)
    assert jnp.allclose(q_bf16, ref2, atol=5e-2, rtol=5e-2)

    print("KERNEL_OK")
</pallas_src>

<mosaic_0001>
module attributes {stable_mosaic.version = 11 : i64} {
  func.func @qnet_kernel(%arg0: i32, %arg1: memref<16x8xf32, #tpu.memory_space<vmem>>, %arg2: memref<64x16xf32, #tpu.memory_space<vmem>>, %arg3: memref<64x1xf32, #tpu.memory_space<vmem>>, %arg4: memref<32x64xf32, #tpu.memory_space<vmem>>, %arg5: memref<32x1xf32, #tpu.memory_space<vmem>>, %arg6: memref<32x1xf32, #tpu.memory_space<vmem>>, %arg7: memref<1xf32, #tpu.memory_space<smem>>, %arg8: memref<1x8xf32, #tpu.memory_space<vmem>>) attributes {dimension_semantics = [#tpu.dimension_semantics<parallel>], iteration_bounds = array<i64: 1>, scalar_prefetch = 0 : i64, scratch_operands = 0 : i64, tpu.core_type = #tpu.core_type<tc>, window_params = [{transform_indices = @transform_0, window_bounds = array<i64: 16, 8>}, {pipeline_mode = #tpu.pipeline_mode<synchronous>, transform_indices = @transform_1, window_bounds = array<i64: 64, 16>}, {pipeline_mode = #tpu.pipeline_mode<synchronous>, transform_indices = @transform_2, window_bounds = array<i64: 64, 1>}, {pipeline_mode = #tpu.pipeline_mode<synchronous>, transform_indices = @transform_3, window_bounds = array<i64: 32, 64>}, {pipeline_mode = #tpu.pipeline_mode<synchronous>, transform_indices = @transform_4, window_bounds = array<i64: 32, 1>}, {pipeline_mode = #tpu.pipeline_mode<synchronous>, transform_indices = @transform_5, window_bounds = array<i64: 32, 1>}, {transform_indices = @transform_6, window_bounds = array<i64: 1>}, {transform_indices = @transform_7, window_bounds = array<i64: 1, 8>}]} {
    %c0 = arith.constant 0 : index
    %c0_0 = arith.constant 0 : index
    %0 = vector.load %arg2[%c0, %c0_0] : memref<64x16xf32, #tpu.memory_space<vmem>>, vector<64x16xf32>
    %c0_1 = arith.constant 0 : index
    %c0_2 = arith.constant 0 : index
    %1 = vector.load %arg1[%c0_1, %c0_2] : memref<16x8xf32, #tpu.memory_space<vmem>>, vector<16x8xf32>
    %cst = arith.constant dense<0.000000e+00> : vector<64x8xf32>
    %2 = tpu.matmul %0, %1, %cst {dimension_numbers = #tpu.dot_dimension_numbers<[1], [0], [0], [1], [0, 0, 1, 1], [], []>} : vector<64x16xf32>, vector<16x8xf32>, vector<64x8xf32> -> vector<64x8xf32>
    %c0_3 = arith.constant 0 : index
    %c0_4 = arith.constant 0 : index
    %3 = vector.load %arg3[%c0_3, %c0_4] : memref<64x1xf32, #tpu.memory_space<vmem>>, vector<64x1xf32>
    %4 = vector.broadcast %3 : vector<64x1xf32> to vector<64x8xf32>
    %5 = arith.addf %2, %4 : vector<64x8xf32>
    %cst_5 = arith.constant 0.000000e+00 : f32
    %6 = vector.broadcast %cst_5 : f32 to vector<64x8xf32>
    %7 = arith.maximumf %5, %6 : vector<64x8xf32>
    %c0_6 = arith.constant 0 : index
    %c0_7 = arith.constant 0 : index
    %8 = vector.load %arg4[%c0_6, %c0_7] : memref<32x64xf32, #tpu.memory_space<vmem>>, vector<32x64xf32>
    %cst_8 = arith.constant dense<0.000000e+00> : vector<32x8xf32>
    %9 = tpu.matmul %8, %7, %cst_8 {dimension_numbers = #tpu.dot_dimension_numbers<[1], [0], [0], [1], [0, 0, 1, 1], [], []>} : vector<32x64xf32>, vector<64x8xf32>, vector<32x8xf32> -> vector<32x8xf32>
    %c0_9 = arith.constant 0 : index
    %c0_10 = arith.constant 0 : index
    %10 = vector.load %arg5[%c0_9, %c0_10] : memref<32x1xf32, #tpu.memory_space<vmem>>, vector<32x1xf32>
    %11 = vector.broadcast %10 : vector<32x1xf32> to vector<32x8xf32>
    %12 = arith.addf %9, %11 : vector<32x8xf32>
    %cst_11 = arith.constant 0.000000e+00 : f32
    %13 = vector.broadcast %cst_11 : f32 to vector<32x8xf32>
    %14 = arith.maximumf %12, %13 : vector<32x8xf32>
    %c0_12 = arith.constant 0 : index
    %c0_13 = arith.constant 0 : index
    %15 = vector.load %arg6[%c0_12, %c0_13] : memref<32x1xf32, #tpu.memory_space<vmem>>, vector<32x1xf32>
    %16 = vector.broadcast %15 : vector<32x1xf32> to vector<32x8xf32>
    %17 = arith.mulf %14, %16 : vector<32x8xf32>
    %cst_14 = arith.constant dense<0.000000e+00> : vector<8xf32>
    %18 = vector.multi_reduction <add>, %17, %cst_14 [0] : vector<32x8xf32> to vector<8xf32>
    %19 = vector.shape_cast %18 : vector<8xf32> to vector<1x8xf32>
    %c0_15 = arith.constant 0 : index
    %20 = memref.load %arg7[%c0_15] : memref<1xf32, #tpu.memory_space<smem>>
    %21 = vector.broadcast %20 : f32 to vector<1x8xf32>
    %22 = arith.addf %19, %21 : vector<1x8xf32>
    %c0_16 = arith.constant 0 : index
    %c0_17 = arith.constant 0 : index
    %23 = vector.load %arg8[%c0_16, %c0_17] : memref<1x8xf32, #tpu.memory_space<vmem>>, vector<1x8xf32>
    tpu.vector_store %arg8[%c0_16, %c0_17], %22 {strides = array<i32>} : memref<1x8xf32, #tpu.memory_space<vmem>>, vector<1x8xf32>,
    return
  }
  func.func @transform_0(%arg0: i32) -> (i32, i32) {
    %c0_i32 = arith.constant 0 : i32
    %c0_i32_0 = arith.constant 0 : i32
    return %c0_i32, %arg0 : i32, i32
  }
  func.func @transform_1(%arg0: i32) -> (i32, i32) {
    %c0_i32 = arith.constant 0 : i32
    %c0_i32_0 = arith.constant 0 : i32
    %c0_i32_1 = arith.constant 0 : i32
    return %c0_i32, %c0_i32_0 : i32, i32
  }
  func.func @transform_2(%arg0: i32) -> (i32, i32) {
    %c0_i32 = arith.constant 0 : i32
    %c0_i32_0 = arith.constant 0 : i32
    %c0_i32_1 = arith.constant 0 : i32
    return %c0_i32, %c0_i32_0 : i32, i32
  }
  func.func @transform_3(%arg0: i32) -> (i32, i32) {
    %c0_i32 = arith.constant 0 : i32
    %c0_i32_0 = arith.constant 0 : i32
    %c0_i32_1 = arith.constant 0 : i32
    return %c0_i32, %c0_i32_0 : i32, i32
  }
  func.func @transform_4(%arg0: i32) -> (i32, i32) {
    %c0_i32 = arith.constant 0 : i32
    %c0_i32_0 = arith.constant 0 : i32
    %c0_i32_1 = arith.constant 0 : i32
    return %c0_i32, %c0_i32_0 : i32, i32
  }
  func.func @transform_5(%arg0: i32) -> (i32, i32) {
    %c0_i32 = arith.constant 0 : i32
    %c0_i32_0 = arith.constant 0 : i32
    %c0_i32_1 = arith.constant 0 : i32
    return %c0_i32, %c0_i32_0 : i32, i32
  }
  func.func @transform_6(%arg0: i32) -> i32 {
    %c0_i32 = arith.constant 0 : i32
    %c0_i32_0 = arith.constant 0 : i32
    return %c0_i32 : i32
  }
  func.func @transform_7(%arg0: i32) -> (i32, i32) {
    %c0_i32 = arith.constant 0 : i32
    %c0_i32_0 = arith.constant 0 : i32
    return %c0_i32, %arg0 : i32, i32
  }
}

</mosaic_0001>

<llo_original>
// kernel: tpu_custom_call.1
$region0: #{tpu_custom_call.1}
  #allocation0 [shape = 'u32[]', space=smem, size = 0x4, offset = 0x4, fixed_abs, tag = 'smem constant byte address 0x4 - core index']
  #allocation1 [shape = 'u32[144,128]{1,0:T(1,128)}', space=vmem, size = 0x12000, scoped, tag = 'internal scratch']
  #allocation2 [shape = 'f32[1]{0:T(128)S(6)}', space=smem, size = 0x200, scoped, tag = 'scoped memory for tpu_custom_call.1']
  %s0 = inlined_call_operand.vmem [shape: f32[16,8], index: 0, kind: input, shape index: {}]
  %s1 = inlined_call_operand.vmem [shape: f32[64,16], index: 1, kind: input, shape index: {}]
  %s2 = inlined_call_operand.vmem [shape: f32[64,1], index: 2, kind: input, shape index: {}]
  %s3 = inlined_call_operand.vmem [shape: f32[32,64], index: 3, kind: input, shape index: {}]
  %s4 = inlined_call_operand.vmem [shape: f32[32,1], index: 4, kind: input, shape index: {}]
  %s5 = inlined_call_operand.vmem [shape: f32[32,1], index: 5, kind: input, shape index: {}]
  %s6 = inlined_call_operand.<no memory space> [shape: f32[1], index: 6, kind: input, shape index: {}]
  %s7 = inlined_call_operand.hbm [shape: f32[1,8], index: 7, kind: output, shape index: {}]
  %s8 = sld [smem:[#allocation0]]
  $region38: #{tpu_custom_call.1} parent=0
    _
  %s10 = ssub.s32 1, %s8
  %s11 = scalar_select 0, %s10, %s8
  %12 = sst [smem:[#allocation2]] %s6
  $region1: #{tpu_custom_call.1} parent=0
    #allocation3 [shape = 'u8[512]{0}', space=vmem, size = 0x400, scoped, tag = 'output window, operand 0, single buffered']
    #allocation4 [shape = 's32[1]{0}', space=sflag, size = 0x4, scoped, tag = 'scoped memory for tpu_custom_call.1']
    %13 = vsyncpa [#allocation4], 0
    // Predicated region
    $region2: #{tpu_custom_call.1} parent=1 // pred_check
      _
    $region3: #{tpu_custom_call.1} parent=1 // pred_check_branch
      %15 = sbr.rel (0) target = $region5
    $region4: #{tpu_custom_call.1} parent=1 // pred_region
      _
    $region5: #{tpu_custom_call.1} parent=1 // pred_fallthru
      _
    // Predicated region
    $region6: #{tpu_custom_call.1} parent=1 // pred_check
      _
    $region7: #{tpu_custom_call.1} parent=1 // pred_check_branch
      %17 = sbr.rel (0) target = $region9
    $region8: #{tpu_custom_call.1} parent=1 // pred_region
      _
    $region9: #{tpu_custom_call.1} parent=1 // pred_fallthru
      _
    // Predicated region
    $region10: #{tpu_custom_call.1} parent=1 // pred_check
      _
    $region11: #{tpu_custom_call.1} parent=1 // pred_check_branch
      %19 = sbr.rel (0) target = $region13
    $region12: #{tpu_custom_call.1} parent=1 // pred_region
      _
    $region13: #{tpu_custom_call.1} parent=1 // pred_fallthru
      _
    // Predicated region
    $region14: #{tpu_custom_call.1} parent=1 // pred_check
      _
    $region15: #{tpu_custom_call.1} parent=1 // pred_check_branch
      %21 = sbr.rel (0) target = $region17
    $region16: #{tpu_custom_call.1} parent=1 // pred_region
      _
    $region17: #{tpu_custom_call.1} parent=1 // pred_fallthru
      _
    // Predicated region
    $region18: #{tpu_custom_call.1} parent=1 // pred_check
      _
    $region19: #{tpu_custom_call.1} parent=1 // pred_check_branch
      %23 = sbr.rel (0) target = $region21
    $region20: #{tpu_custom_call.1} parent=1 // pred_region
      _
    $region21: #{tpu_custom_call.1} parent=1 // pred_fallthru
      _
    // Predicated region
    $region22: #{tpu_custom_call.1} parent=1 // pred_check
      _
    $region23: #{tpu_custom_call.1} parent=1 // pred_check_branch
      %25 = sbr.rel (0) target = $region25
    $region24: #{tpu_custom_call.1} parent=1 // pred_region
      _
    $region25: #{tpu_custom_call.1} parent=1 // pred_fallthru
      _
    // Predicated region
    $region26: #{tpu_custom_call.1} parent=1 // pred_check
      _
    $region27: #{tpu_custom_call.1} parent=1 // pred_check_branch
      %27 = sbr.rel (0) target = $region29
    $region28: #{tpu_custom_call.1} parent=1 // pred_region
      _
    $region29: #{tpu_custom_call.1} parent=1 // pred_fallthru
      _
    %v28 = vld [vmem:[%s1] sm:$0xff]
    %v29 = vld [vmem:[%s1 + $0x8] sm:$0xff]
    %v30 = vld [vmem:[%s1 + $0x10] sm:$0xff]
    %v31 = vld [vmem:[%s1 + $0x18] sm:$0xff]
    %v32 = vld [vmem:[%s1 + $0x20] sm:$0xff]
    %v33 = vld [vmem:[%s1 + $0x28] sm:$0xff]
    %v34 = vld [vmem:[%s1 + $0x30] sm:$0xff]
    %v35 = vld [vmem:[%s1 + $0x38] sm:$0xff]
    %v36 = vld [vmem:[%s0] sm:$0xff]
    %v37 = vld [vmem:[%s0 + $0x8] sm:$0xff]
    %v38 = vld [vmem:[%s2] sm:$0xff]
    %v39 = vld [vmem:[%s2 + $0x8] sm:$0xff]
    %v40 = vld [vmem:[%s2 + $0x10] sm:$0xff]
    %v41 = vld [vmem:[%s2 + $0x18] sm:$0xff]
    %v42 = vld [vmem:[%s2 + $0x20] sm:$0xff]
    %v43 = vld [vmem:[%s2 + $0x28] sm:$0xff]
    %v44 = vld [vmem:[%s2 + $0x30] sm:$0xff]
    %v45 = vld [vmem:[%s2 + $0x38] sm:$0xff]
    %47 = vset.pattern.permute.xlu0 0
    %48 = vperm.xlu0 %47, %v38
    %v49 = vpop.permute.xlu0 %48
    %52 = vset.pattern.permute.xlu0 0
    %53 = vperm.xlu0 %52, %v39
    %v54 = vpop.permute.xlu0 %53
    %57 = vset.pattern.permute.xlu0 0
    %58 = vperm.xlu0 %57, %v40
    %v59 = vpop.permute.xlu0 %58
    %62 = vset.pattern.permute.xlu0 0
    %63 = vperm.xlu0 %62, %v41
    %v64 = vpop.permute.xlu0 %63
    %67 = vset.pattern.permute.xlu0 0
    %68 = vperm.xlu0 %67, %v42
    %v69 = vpop.permute.xlu0 %68
    %72 = vset.pattern.permute.xlu0 0
    %73 = vperm.xlu0 %72, %v43
    %v74 = vpop.permute.xlu0 %73
    %77 = vset.pattern.permute.xlu0 0
    %78 = vperm.xlu0 %77, %v44
    %v79 = vpop.permute.xlu0 %78
    %82 = vset.pattern.permute.xlu0 0
    %83 = vperm.xlu0 %82, %v45
    %v84 = vpop.permute.xlu0 %83
    %vm86 = vcmask 130048
    %v88 = vsel %vm86, %v28, 0
    %v91 = vsel %vm86, %v29, 0
    %v94 = vsel %vm86, %v30, 0
    %v97 = vsel %vm86, %v31, 0
    %v100 = vsel %vm86, %v32, 0
    %v103 = vsel %vm86, %v33, 0
    %v106 = vsel %vm86, %v34, 0
    %v109 = vsel %vm86, %v35, 0
    %111 = vmatprep.subr.mxu0 0.0
    %112 = vmatpush1.msra.mxu0 %v36
    %113 = vmatprep.subr.mxu0 0.0
    %114 = vmatpush1.msra.mxu0 %v37
    %115 = vmatprep.subr.mxu0 0.0
    %116 = vmatpush1.msra.mxu0 0.0
    %117 = vmatprep.subr.mxu0 0.0
    %118 = vmatpush1.msra.mxu0 0.0
    %119 = vmatprep.subr.mxu0 0.0
    %120 = vmatpush1.msra.mxu0 0.0
    %121 = vmatprep.subr.mxu0 0.0
    %122 = vmatpush1.msra.mxu0 0.0
    %123 = vmatprep.subr.mxu0 0.0
    %124 = vmatpush1.msra.mxu0 0.0
    %125 = vmatprep.subr.mxu0 0.0
    %126 = vmatpush1.msra.mxu0 0.0
    %127 = vmatprep.subr.mxu0 0.0
    %128 = vmatpush1.msra.mxu0 0.0
    %129 = vmatprep.subr.mxu0 0.0
    %130 = vmatpush1.msra.mxu0 0.0
    %131 = vmatprep.subr.mxu0 0.0
    %132 = vmatpush1.msra.mxu0 0.0
    %133 = vmatprep.subr.mxu0 0.0
    %134 = vmatpush1.msra.mxu0 0.0
    %135 = vmatprep.subr.mxu0 0.0
    %136 = vmatpush1.msra.mxu0 0.0
    %137 = vmatprep.subr.mxu0 0.0
    %138 = vmatpush1.msra.mxu0 0.0
    %139 = vmatprep.subr.mxu0 0.0
    %140 = vmatpush1.msra.mxu0 0.0
    %141 = vmatprep.subr.mxu0 0.0
    %142 = vmatpush1.msra.mxu0 0.0
    %143 = vmatprep.subr.mxu0 0.0
    %144 = vmatpush1.msra.mxu0 0.0
    %145 = vmatprep.subr.mxu0 0.0
    %146 = vmatpush1.msra.mxu0 0.0
    %147 = vmatprep.subr.mxu0 0.0
    %148 = vmatpush1.msra.mxu0 0.0
    %149 = vmatprep.subr.mxu0 0.0
    %150 = vmatpush1.msra.mxu0 0.0
    %151 = vmatprep.subr.mxu0 0.0
    %152 = vmatpush1.msra.mxu0 0.0
    %153 = vmatprep.subr.mxu0 0.0
    %154 = vmatpush1.msra.mxu0 0.0
    %155 = vmatprep.subr.mxu0 0.0
    %156 = vmatpush1.msra.mxu0 0.0
    %157 = vmatprep.subr.mxu0 0.0
    %158 = vmatpush1.msra.mxu0 0.0
    %159 = vmatprep.subr.mxu0 0.0
    %160 = vmatpush1.msra.mxu0 0.0
    %161 = vmatprep.subr.mxu0 0.0
    %162 = vmatpush1.msra.mxu0 0.0
    %163 = vmatprep.subr.mxu0 0.0
    %164 = vmatpush1.msra.mxu0 0.0
    %165 = vmatprep.subr.mxu0 0.0
    %166 = vmatpush1.msra.mxu0 0.0
    %167 = vmatprep.subr.mxu0 0.0
    %168 = vmatpush1.msra.mxu0 0.0
    %169 = vmatprep.subr.mxu0 0.0
    %170 = vmatpush1.msra.mxu0 0.0
    %171 = vmatprep.subr.mxu0 0.0
    %172 = vmatpush1.msra.mxu0 0.0
    %173 = vmatprep.subr.mxu0 0.0
    %174 = vmatpush1.msra.mxu0 0.0
    %175 = vmatprep.mubr.f32.mxu0 0.0
    %176 = vmatmul.mubr.f32.gmra.mrb[0].mxu0 %v88
    %v177 = vpop.f32.mrb[0].mxu0
    %v178 = vadd.f32 %v49, %v177
    %v179 = vpop.f32.mrb[0].mxu0
    %180 = vmatprep.mubr.f32.mxu0 0.0
    %181 = vmatmul.mubr.f32.gmra.mrb[0].mxu0 %v91
    %v182 = vpop.f32.mrb[0].mxu0
    %v183 = vadd.f32 %v54, %v182
    %v184 = vpop.f32.mrb[0].mxu0
    %185 = vmatprep.mubr.f32.mxu0 0.0
    %186 = vmatmul.mubr.f32.gmra.mrb[0].mxu0 %v94
    %v187 = vpop.f32.mrb[0].mxu0
    %v188 = vadd.f32 %v59, %v187
    %v189 = vpop.f32.mrb[0].mxu0
    %190 = vmatprep.mubr.f32.mxu0 0.0
    %191 = vmatmul.mubr.f32.gmra.mrb[0].mxu0 %v97
    %v192 = vpop.f32.mrb[0].mxu0
    %v193 = vadd.f32 %v64, %v192
    %v194 = vpop.f32.mrb[0].mxu0
    %195 = vmatprep.mubr.f32.mxu0 0.0
    %196 = vmatmul.mubr.f32.gmra.mrb[0].mxu0 %v100
    %v197 = vpop.f32.mrb[0].mxu0
    %v198 = vadd.f32 %v69, %v197
    %v199 = vpop.f32.mrb[0].mxu0
    %200 = vmatprep.mubr.f32.mxu0 0.0
    %201 = vmatmul.mubr.f32.gmra.mrb[0].mxu0 %v103
    %v202 = vpop.f32.mrb[0].mxu0
    %v203 = vadd.f32 %v74, %v202
    %v204 = vpop.f32.mrb[0].mxu0
    %205 = vmatprep.mubr.f32.mxu0 0.0
    %206 = vmatmul.mubr.f32.gmra.mrb[0].mxu0 %v106
    %v207 = vpop.f32.mrb[0].mxu0
    %v208 = vadd.f32 %v79, %v207
    %v209 = vpop.f32.mrb[0].mxu0
    %210 = vmatprep.mubr.f32.mxu0 0.0
    %211 = vmatmul.mubr.f32.gmra.mrb[0].mxu0 %v109
    %v212 = vpop.f32.mrb[0].mxu0
    %v213 = vadd.f32 %v84, %v212
    %v214 = vpop.f32.mrb[0].mxu0
    %215 = vdwg.mxu0
    %v216 = vmax.f32 %v178, 0.0
    %v217 = vmax.f32 %v183, 0.0
    %v218 = vmax.f32 %v188, 0.0
    %v219 = vmax.f32 %v193, 0.0
    %v220 = vmax.f32 %v198, 0.0
    %v221 = vmax.f32 %v203, 0.0
    %v222 = vmax.f32 %v208, 0.0
    %v223 = vmax.f32 %v213, 0.0
    %v224 = vld [vmem:[%s3] sm:$0xff]
    %v225 = vld [vmem:[%s3 + $0x8] sm:$0xff]
    %v226 = vld [vmem:[%s3 + $0x10] sm:$0xff]
    %v227 = vld [vmem:[%s3 + $0x18] sm:$0xff]
    %v228 = vld [vmem:[%s4] sm:$0xff]
    %v229 = vld [vmem:[%s4 + $0x8] sm:$0xff]
    %v230 = vld [vmem:[%s4 + $0x10] sm:$0xff]
    %v231 = vld [vmem:[%s4 + $0x18] sm:$0xff]
    %233 = vset.pattern.permute.xlu0 0
    %234 = vperm.xlu0 %233, %v228
    %v235 = vpop.permute.xlu0 %234
    %238 = vset.pattern.permute.xlu0 0
    %239 = vperm.xlu0 %238, %v229
    %v240 = vpop.permute.xlu0 %239
    %243 = vset.pattern.permute.xlu0 0
    %244 = vperm.xlu0 %243, %v230
    %v245 = vpop.permute.xlu0 %244
    %248 = vset.pattern.permute.xlu0 0
    %249 = vperm.xlu0 %248, %v231
    %v250 = vpop.permute.xlu0 %249
    %vm252 = vcmask 523264
    %v254 = vsel %vm252, %v224, 0
    %v257 = vsel %vm252, %v225, 0
    %v260 = vsel %vm252, %v226, 0
    %v263 = vsel %vm252, %v227, 0
    %265 = vmatprep.subr.mxu0 0.0
    %266 = vmatpush1.msra.mxu0 %v216
    %267 = vmatprep.subr.mxu0 0.0
    %268 = vmatpush1.msra.mxu0 %v217
    %269 = vmatprep.subr.mxu0 0.0
    %270 = vmatpush1.msra.mxu0 %v218
    %271 = vmatprep.subr.mxu0 0.0
    %272 = vmatpush1.msra.mxu0 %v219
    %273 = vmatprep.subr.mxu0 0.0
    %274 = vmatpush1.msra.mxu0 %v220
    %275 = vmatprep.subr.mxu0 0.0
    %276 = vmatpush1.msra.mxu0 %v221
    %277 = vmatprep.subr.mxu0 0.0
    %278 = vmatpush1.msra.mxu0 %v222
    %279 = vmatprep.subr.mxu0 0.0
    %280 = vmatpush1.msra.mxu0 %v223
    %281 = vmatprep.subr.mxu0 0.0
    %282 = vmatpush1.msra.mxu0 0.0
    %283 = vmatprep.subr.mxu0 0.0
    %284 = vmatpush1.msra.mxu0 0.0
    %285 = vmatprep.subr.mxu0 0.0
    %286 = vmatpush1.msra.mxu0 0.0
    %287 = vmatprep.subr.mxu0 0.0
    %288 = vmatpush1.msra.mxu0 0.0
    %289 = vmatprep.subr.mxu0 0.0
    %290 = vmatpush1.msra.mxu0 0.0
    %291 = vmatprep.subr.mxu0 0.0
    %292 = vmatpush1.msra.mxu0 0.0
    %293 = vmatprep.subr.mxu0 0.0
    %294 = vmatpush1.msra.mxu0 0.0
    %295 = vmatprep.subr.mxu0 0.0
    %296 = vmatpush1.msra.mxu0 0.0
    %297 = vmatprep.subr.mxu0 0.0
    %298 = vmatpush1.msra.mxu0 0.0
    %299 = vmatprep.subr.mxu0 0.0
    %300 = vmatpush1.msra.mxu0 0.0
    %301 = vmatprep.subr.mxu0 0.0
    %302 = vmatpush1.msra.mxu0 0.0
    %303 = vmatprep.subr.mxu0 0.0
    %304 = vmatpush1.msra.mxu0 0.0
    %305 = vmatprep.subr.mxu0 0.0
    %306 = vmatpush1.msra.mxu0 0.0
    %307 = vmatprep.subr.mxu0 0.0
    %308 = vmatpush1.msra.mxu0 0.0
    %309 = vmatprep.subr.mxu0 0.0
    %310 = vmatpush1.msra.mxu0 0.0
    %311 = vmatprep.subr.mxu0 0.0
    %312 = vmatpush1.msra.mxu0 0.0
    %313 = vmatprep.subr.mxu0 0.0
    %314 = vmatpush1.msra.mxu0 0.0
    %315 = vmatprep.subr.mxu0 0.0
    %316 = vmatpush1.msra.mxu0 0.0
    %317 = vmatprep.subr.mxu0 0.0
    %318 = vmatpush1.msra.mxu0 0.0
    %319 = vmatprep.subr.mxu0 0.0
    %320 = vmatpush1.msra.mxu0 0.0
    %321 = vmatprep.subr.mxu0 0.0
    %322 = vmatpush1.msra.mxu0 0.0
    %323 = vmatprep.subr.mxu0 0.0
    %324 = vmatpush1.msra.mxu0 0.0
    %325 = vmatprep.subr.mxu0 0.0
    %326 = vmatpush1.msra.mxu0 0.0
    %327 = vmatprep.subr.mxu0 0.0
    %328 = vmatpush1.msra.mxu0 0.0
    %329 = vmatprep.mubr.f32.mxu0 0.0
    %330 = vmatmul.mubr.f32.gmra.mrb[0].mxu0 %v254
    %v331 = vpop.f32.mrb[0].mxu0
    %v332 = vadd.f32 %v235, %v331
    %v333 = vpop.f32.mrb[0].mxu0
    %334 = vmatprep.mubr.f32.mxu0 0.0
    %335 = vmatmul.mubr.f32.gmra.mrb[0].mxu0 %v257
    %v336 = vpop.f32.mrb[0].mxu0
    %v337 = vadd.f32 %v240, %v336
    %v338 = vpop.f32.mrb[0].mxu0
    %339 = vmatprep.mubr.f32.mxu0 0.0
    %340 = vmatmul.mubr.f32.gmra.mrb[0].mxu0 %v260
    %v341 = vpop.f32.mrb[0].mxu0
    %v342 = vadd.f32 %v245, %v341
    %v343 = vpop.f32.mrb[0].mxu0
    %344 = vmatprep.mubr.f32.mxu0 0.0
    %345 = vmatmul.mubr.f32.gmra.mrb[0].mxu0 %v263
    %v346 = vpop.f32.mrb[0].mxu0
    %v347 = vadd.f32 %v250, %v346
    %v348 = vpop.f32.mrb[0].mxu0
    %349 = vdwg.mxu0
    %v350 = vmax.f32 %v332, 0.0
    %v351 = vmax.f32 %v337, 0.0
    %v352 = vmax.f32 %v342, 0.0
    %v353 = vmax.f32 %v347, 0.0
    %v354 = vld [vmem:[%s5] sm:$0xff]
    %v355 = vld [vmem:[%s5 + $0x8] sm:$0xff]
    %v356 = vld [vmem:[%s5 + $0x10] sm:$0xff]
    %v357 = vld [vmem:[%s5 + $0x18] sm:$0xff]
    %359 = vset.pattern.permute.xlu0 0
    %360 = vperm.xlu0 %359, %v354
    %v361 = vpop.permute.xlu0 %360
    %364 = vset.pattern.permute.xlu0 0
    %365 = vperm.xlu0 %364, %v355
    %v366 = vpop.permute.xlu0 %365
    %369 = vset.pattern.permute.xlu0 0
    %370 = vperm.xlu0 %369, %v356
    %v371 = vpop.permute.xlu0 %370
    %374 = vset.pattern.permute.xlu0 0
    %375 = vperm.xlu0 %374, %v357
    %v376 = vpop.permute.xlu0 %375
    %v378 = vmul.f32 %v350, %v361
    %v379 = vmul.f32 %v351, %v366
    %v380 = vmul.f32 %v352, %v371
    %v381 = vmul.f32 %v353, %v376
    %vm382 = vcmask 64512
    %v383 = vsel %vm382, %v378, 0.0
    %v384 = vsel %vm382, %v379, 0.0
    %v385 = vadd.f32 %v383, %v384
    %v386 = vsel %vm382, %v380, 0.0
    %v387 = vadd.f32 %v385, %v386
    %v388 = vsel %vm382, %v381, 0.0
    %v389 = vadd.f32 %v387, %v388
    %v390 = vrot.slane %v389, 4
    %v391 = vadd.f32 %v389, %v390
    %v392 = vrot.slane %v391, 2
    %v393 = vadd.f32 %v391, %v392
    %v394 = vrot.slane %v393, 1
    %v395 = vadd.f32 %v393, %v394
    %s396 = sld [smem:[#allocation2]]
    %v397 = vstv %s396
    %v398 = vadd.f32 %v395, %v397
    %vm399 = vcmask 57344
    %400 = vst.msk [vmem:[#allocation3] sm:$0x1] %vm399, %v398
    // Predicated region
    $region30: #{tpu_custom_call.1} parent=1 // pred_check
      _
    $region31: #{tpu_custom_call.1} parent=1 // pred_check_branch
      %402 = sbr.rel (0) target = $region33
    $region32: #{tpu_custom_call.1} parent=1 // pred_region
      %s404 = ssub.s32 16, 16
      %405 = vsyncadd [#allocation4], %s404
      %s407 = sshll.u32 [#allocation3], 4
      %s408 = int_to_ptr.vmem [resolvable:$true] %s407
      %410 = dma.vmem_to_hbm [thread:$0]  %s408, 16, %s7, [#allocation4]
    $region33: #{tpu_custom_call.1} parent=1 // pred_fallthru
      _
    // Predicated region
    $region34: #{tpu_custom_call.1} parent=1 // pred_check
      _
    $region35: #{tpu_custom_call.1} parent=1 // pred_check_branch
      %412 = sbr.rel (0) target = $region37
    $region36: #{tpu_custom_call.1} parent=1 // pred_region
      %413 = dma.done [#allocation4], 16
    $region37: #{tpu_custom_call.1} parent=1 // pred_fallthru
      _
    %414 = vsyncpa [#allocation4], 1

</llo_original>
